<compile_context>
chip_gen: v5e
topology: v5e:2x2
jax: 0.10.0
libtpu: 0.0.40
codegen_flags: <defaults>
</compile_context>

<pallas_src>
import functools

import jax
import jax.numpy as jnp
from jax.experimental import pallas as pl
from jax.experimental.pallas import tpu as pltpu

EPS = 1e-5
_VMEM_CAP = 64 << 20           # valid ceiling on v5e/v6e (128 MiB phys) and v7x (64 MiB phys)
_X_RESIDENT_BUDGET = 24 << 20  # keep x fully resident if its double-buffered slab fits this


# ----------------------------------------------------------------------------- kernels
def _bn_relu_finalize(z, gamma_ref, beta_ref, o_ref, mean_ref, var_ref):
    """Training-mode BatchNorm1d + ReLU on an f32 slab resident in VMEM."""
    inv_n = 1.0 / z.shape[0]
    # Two-pass statistics: z is resident, the extra sweep is a single VPU/XLU
    # pass per output tile and avoids E[z^2]-E[z]^2 cancellation.
    mean = jnp.sum(z, axis=0, keepdims=True) * inv_n
    centered = z - mean
    var = jnp.sum(centered * centered, axis=0, keepdims=True) * inv_n  # biased, as PyTorch BN fwd
    scale = gamma_ref[...].astype(jnp.float32) * jax.lax.rsqrt(var + EPS)
    y = centered * scale + beta_ref[...].astype(jnp.float32)
    o_ref[...] = jnp.maximum(y, 0.0).astype(o_ref.dtype)
    mean_ref[...] = mean
    var_ref[...] = var


def _kernel_single_k(x_ref, w_ref, gamma_ref, beta_ref,
                     o_ref, mean_ref, var_ref, *, compute_dtype):
    # x is fully resident (constant index_map): one MXU matmul per output tile.
    # Casts are per-tile VPU work, negligible next to the (n x K x tile_out) MACs.
    z = jnp.dot(x_ref[...].astype(compute_dtype),
                w_ref[...].astype(compute_dtype),
                preferred_element_type=jnp.float32)
    _bn_relu_finalize(z, gamma_ref, beta_ref, o_ref, mean_ref, var_ref)


def _kernel_multi_k(x_ref, w_ref, gamma_ref, beta_ref,
                    o_ref, mean_ref, var_ref, acc_ref, *, compute_dtype):
    k = pl.program_id(1)

    @pl.when(k == 0)
    def _():
        acc_ref[...] = jnp.zeros_like(acc_ref)

    acc_ref[...] += jnp.dot(x_ref[...].astype(compute_dtype),
                            w_ref[...].astype(compute_dtype),
                            preferred_element_type=jnp.float32)

    @pl.when(k == pl.num_programs(1) - 1)
    def _():
        _bn_relu_finalize(acc_ref[...], gamma_ref, beta_ref,
                          o_ref, mean_ref, var_ref)


# ----------------------------------------------------------------------------- wrappers
def prepare_params(weight, bias, gamma, beta, *, compute_dtype=jnp.bfloat16):
    """One-time parameter preparation (keep OUT of the per-call path).

    weight: (out_planes, in_planes)  -- PyTorch nn.Linear layout
    bias:   (out_planes,) or None    -- dropped: training-mode BN subtracts the
            batch mean, which exactly cancels a per-feature constant.
    Returns (w_t, gamma2, beta2): w_t is (in_planes, out_planes) in
    compute_dtype; gamma2 / beta2 are (1, out_planes) f32.
    """
    del bias
    w_t = jnp.asarray(weight).T.astype(compute_dtype)
    gamma2 = jnp.asarray(gamma).reshape(1, -1).astype(jnp.float32)
    beta2 = jnp.asarray(beta).reshape(1, -1).astype(jnp.float32)
    return w_t, gamma2, beta2


@functools.partial(
    jax.jit,
    static_argnames=("tile_out", "tile_k", "compute_dtype", "out_dtype",
                     "weight_buffers", "return_batch_stats"))
def linear_block(x, w_t, gamma, beta, *, tile_out=None, tile_k=None,
                 compute_dtype=jnp.bfloat16, out_dtype=None,
                 weight_buffers=None, return_batch_stats=False):
    """Fused Linear -> BatchNorm1d (training mode) -> ReLU.

    x:   (N, in_planes)
    w_t: (in_planes, out_planes)  -- from prepare_params (pre-transposed)
    gamma, beta: (out_planes,) or (1, out_planes)
    Returns (N, out_planes); with return_batch_stats=True also returns the
    bias-free batch mean and biased batch variance, each (out_planes,).
    """
    n, in_planes = x.shape
    k_dim, out_planes = w_t.shape
    assert k_dim == in_planes, "w_t must be (in_planes, out_planes); use prepare_params"

    if out_dtype is None:
        out_dtype = x.dtype
    gamma2 = gamma.reshape(1, out_planes).astype(jnp.float32)
    beta2 = beta.reshape(1, out_planes).astype(jnp.float32)

    x_bytes = jnp.dtype(x.dtype).itemsize
    w_bytes = jnp.dtype(w_t.dtype).itemsize
    out_bytes = jnp.dtype(out_dtype).itemsize

    # ---- tile_out: lane multiple, and >= 2 tiles whenever out_planes allows so
    #      the "parallel" j axis feeds both v7x TensorCores / megacore.
    if tile_out is None:
        if out_planes % 128 != 0:
            tile_out = out_planes                      # odd shapes: single full tile
        else:
            tile_out = 128
            for cand in (512, 256):
                if out_planes % cand == 0 and out_planes // cand >= 2:
                    tile_out = cand
                    break
    assert out_planes % tile_out == 0, "out_planes must be a multiple of tile_out"

    # ---- tile_k: keep x fully resident (one DMA, constant index_map) when it
    #      fits the budget; otherwise tile K and accumulate in f32 scratch.
    if tile_k is None:
        if in_planes % 128 != 0 or 2 * n * in_planes * x_bytes <= _X_RESIDENT_BUDGET:
            tile_k = in_planes
        else:
            tile_k = 128
            for cand in (1024, 512, 256):
                if in_planes % cand == 0 and 2 * n * cand * x_bytes <= _X_RESIDENT_BUDGET:
                    tile_k = cand
                    break
    assert in_planes % tile_k == 0, "in_planes must be a multiple of tile_k"

    grid_j = out_planes // tile_out
    grid_k = in_planes // tile_k
    multi_k = grid_k > 1

    # ---- weight multi-buffering: hides per-step DMA latency when per-step MXU
    #      work is tiny (small N) and there are enough steps to pipeline.
    if weight_buffers is None:
        weight_buffers = 3 if (n <= 256 and grid_j * grid_k >= 8
                               and tile_k * tile_out * w_bytes <= (1 << 20)) else 2
    w_block_kwargs = {} if weight_buffers <= 2 else {"pipeline_mode": pl.Buffered(weight_buffers)}

    # ---- explicit VMEM budget (default scoped limit is only 16/32 MiB).
    vmem_est = (2 * n * tile_k * x_bytes                        # x blocks (double-buffered)
                + weight_buffers * tile_k * tile_out * w_bytes  # weight blocks
                + 2 * n * tile_out * out_bytes                  # y output blocks
                + 2 * 2 * tile_out * 4                          # gamma / beta blocks
                + 2 * 2 * tile_out * 4                          # mean / var output blocks
                + (n * tile_out * 4 if multi_k else 0))         # f32 accumulator scratch
    vmem_limit = int(min(max(vmem_est + vmem_est // 4 + (4 << 20), 32 << 20), _VMEM_CAP))

    out_shapes = (
        jax.ShapeDtypeStruct((n, out_planes), out_dtype),
        jax.ShapeDtypeStruct((1, out_planes), jnp.float32),
        jax.ShapeDtypeStruct((1, out_planes), jnp.float32),
    )

    if multi_k:
        kernel = functools.partial(_kernel_multi_k, compute_dtype=compute_dtype)
        grid = (grid_j, grid_k)                        # reduction axis last
        in_specs = [
            pl.BlockSpec((n, tile_k), lambda j, k: (0, k)),                       # x K-slab
            pl.BlockSpec((tile_k, tile_out), lambda j, k: (k, j), **w_block_kwargs),  # W^T tile
            pl.BlockSpec((1, tile_out), lambda j, k: (0, j)),                     # gamma
            pl.BlockSpec((1, tile_out), lambda j, k: (0, j)),                     # beta
        ]
        out_specs = [
            pl.BlockSpec((n, tile_out), lambda j, k: (0, j)),
            pl.BlockSpec((1, tile_out), lambda j, k: (0, j)),
            pl.BlockSpec((1, tile_out), lambda j, k: (0, j)),
        ]
        scratch_shapes = [pltpu.VMEM((n, tile_out), jnp.float32)]
        dim_sem = ("parallel", "arbitrary")
    else:
        kernel = functools.partial(_kernel_single_k, compute_dtype=compute_dtype)
        grid = (grid_j,)
        in_specs = [
            pl.BlockSpec((n, in_planes), lambda j: (0, 0)),                       # x resident
            pl.BlockSpec((in_planes, tile_out), lambda j: (0, j), **w_block_kwargs),
            pl.BlockSpec((1, tile_out), lambda j: (0, j)),
            pl.BlockSpec((1, tile_out), lambda j: (0, j)),
        ]
        out_specs = [
            pl.BlockSpec((n, tile_out), lambda j: (0, j)),
            pl.BlockSpec((1, tile_out), lambda j: (0, j)),
            pl.BlockSpec((1, tile_out), lambda j: (0, j)),
        ]
        scratch_shapes = []
        dim_sem = ("parallel",)

    y, mean, var = pl.pallas_call(
        kernel,
        out_shape=out_shapes,
        grid_spec=pltpu.PrefetchScalarGridSpec(
            num_scalar_prefetch=0,
            grid=grid,
            in_specs=in_specs,
            out_specs=out_specs,
            scratch_shapes=scratch_shapes,
        ),
        compiler_params=pltpu.CompilerParams(
            dimension_semantics=dim_sem,
            vmem_limit_bytes=vmem_limit,
        ),
    )(x, w_t, gamma2, beta2)

    if return_batch_stats:
        # TODO(synk): running_mean/running_var momentum update (in-place module
        # state in PyTorch) is left to the caller; note the returned mean is of
        # the bias-free pre-activation (the Linear bias is cancelled by BN).
        return y, mean.reshape(out_planes), var.reshape(out_planes)
    return y


# ----------------------------------------------------------------------------- reference
def _reference(x, weight, bias, gamma, beta):
    z = x @ weight.T + bias[None, :]
    mean = jnp.mean(z, axis=0, keepdims=True)
    var = jnp.mean((z - mean) ** 2, axis=0, keepdims=True)   # biased, as PyTorch BN fwd
    z_hat = (z - mean) * jax.lax.rsqrt(var + EPS)
    return jnp.maximum(z_hat * gamma[None, :] + beta[None, :], 0.0)


if __name__ == "__main__":
    N, IN_PLANES, OUT_PLANES = 8, 32, 256

    key = jax.random.PRNGKey(0)
    kx, kw, kb, kx2, kw2 = jax.random.split(key, 5)

    x = jax.random.normal(kx, (N, IN_PLANES), dtype=jnp.float32)
    bound = 1.0 / (IN_PLANES ** 0.5)             # nn.Linear default init
    weight = jax.random.uniform(kw, (OUT_PLANES, IN_PLANES), jnp.float32, -bound, bound)
    bias = jax.random.uniform(kb, (OUT_PLANES,), jnp.float32, -bound, bound)
    gamma = jnp.ones((OUT_PLANES,), jnp.float32)  # BatchNorm1d defaults
    beta = jnp.zeros((OUT_PLANES,), jnp.float32)

    ref = _reference(x, weight, bias, gamma, beta)

    # 1) Production config: bf16 MXU operands, bf16 weight shipped once from prep.
    w_bf16, g2, b2 = prepare_params(weight, bias, gamma, beta, compute_dtype=jnp.bfloat16)
    out = jax.block_until_ready(linear_block(x, w_bf16, g2, b2))
    assert out.shape == (N, OUT_PLANES)
    assert jnp.allclose(out, ref, atol=5e-2, rtol=5e-2), "bf16 path mismatch vs reference"

    # 2) f32 compute path (tight check) + batch-stat outputs (single-K, x-resident grid).
    w_f32, g2f, b2f = prepare_params(weight, bias, gamma, beta, compute_dtype=jnp.float32)
    out32, bmean, bvar = linear_block(x, w_f32, g2f, b2f,
                                      compute_dtype=jnp.float32, return_batch_stats=True)
    out32 = jax.block_until_ready(out32)
    assert jnp.allclose(out32, ref, atol=1e-3, rtol=1e-3), "f32 path mismatch vs reference"
    z_nb = x @ weight.T                                     # bias-free pre-activation
    z_mean = jnp.mean(z_nb, axis=0)
    z_var = jnp.mean((z_nb - z_mean[None, :]) ** 2, axis=0)
    assert jnp.allclose(bmean, z_mean, atol=1e-3, rtol=1e-3), "batch mean mismatch"
    assert jnp.allclose(bvar, z_var, atol=1e-3, rtol=1e-3), "batch var mismatch"

    # 3) Multi-K (K-grid + f32 accumulator) path: force tile_k < in_planes.
    IN2 = 256
    x2 = jax.random.normal(kx2, (N, IN2), dtype=jnp.float32)
    bound2 = 1.0 / (IN2 ** 0.5)
    weight2 = jax.random.uniform(kw2, (OUT_PLANES, IN2), jnp.float32, -bound2, bound2)
    w2_f32, g2f2, b2f2 = prepare_params(weight2, None, gamma, beta, compute_dtype=jnp.float32)
    out2 = jax.block_until_ready(
        linear_block(x2, w2_f32, g2f2, b2f2, compute_dtype=jnp.float32, tile_k=128))
    ref2 = _reference(x2, weight2, jnp.zeros((OUT_PLANES,), jnp.float32), gamma, beta)
    assert jnp.allclose(out2, ref2, atol=1e-3, rtol=1e-3), "multi-K path mismatch vs reference"

    print("KERNEL_OK")
</pallas_src>

<mosaic_0001>
module attributes {stable_mosaic.version = 11 : i64} {
  func.func @_kernel_single_k(%arg0: i32, %arg1: memref<8x32xf32, #tpu.memory_space<vmem>>, %arg2: memref<32x128xbf16, #tpu.memory_space<vmem>>, %arg3: memref<1x128xf32, #tpu.memory_space<vmem>>, %arg4: memref<1x128xf32, #tpu.memory_space<vmem>>, %arg5: memref<8x128xf32, #tpu.memory_space<vmem>>, %arg6: memref<1x128xf32, #tpu.memory_space<vmem>>, %arg7: memref<1x128xf32, #tpu.memory_space<vmem>>) attributes {dimension_semantics = [#tpu.dimension_semantics<parallel>], iteration_bounds = array<i64: 2>, scalar_prefetch = 0 : i64, scratch_operands = 0 : i64, tpu.core_type = #tpu.core_type<tc>, window_params = [{pipeline_mode = #tpu.pipeline_mode<synchronous>, transform_indices = @transform_0, window_bounds = array<i64: 8, 32>}, {transform_indices = @transform_1, window_bounds = array<i64: 32, 128>}, {transform_indices = @transform_2, window_bounds = array<i64: 1, 128>}, {transform_indices = @transform_3, window_bounds = array<i64: 1, 128>}, {transform_indices = @transform_4, window_bounds = array<i64: 8, 128>}, {transform_indices = @transform_5, window_bounds = array<i64: 1, 128>}, {transform_indices = @transform_6, window_bounds = array<i64: 1, 128>}]} {
    %c0 = arith.constant 0 : index
    %c0_0 = arith.constant 0 : index
    %0 = vector.load %arg1[%c0, %c0_0] : memref<8x32xf32, #tpu.memory_space<vmem>>, vector<8x32xf32>
    %1 = arith.truncf %0 : vector<8x32xf32> to vector<8x32xbf16>
    %c0_1 = arith.constant 0 : index
    %c0_2 = arith.constant 0 : index
    %2 = vector.load %arg2[%c0_1, %c0_2] : memref<32x128xbf16, #tpu.memory_space<vmem>>, vector<32x128xbf16>
    %cst = arith.constant dense<0.000000e+00> : vector<8x128xf32>
    %3 = tpu.matmul %1, %2, %cst {dimension_numbers = #tpu.dot_dimension_numbers<[1], [0], [0], [1], [0, 0, 1, 1], [], []>} : vector<8x32xbf16>, vector<32x128xbf16>, vector<8x128xf32> -> vector<8x128xf32>
    %cst_3 = arith.constant dense<0.000000e+00> : vector<128xf32>
    %4 = vector.multi_reduction <add>, %3, %cst_3 [0] : vector<8x128xf32> to vector<128xf32>
    %5 = vector.shape_cast %4 : vector<128xf32> to vector<1x128xf32>
    %cst_4 = arith.constant 1.250000e-01 : f32
    %6 = vector.broadcast %cst_4 : f32 to vector<1x128xf32>
    %7 = arith.mulf %5, %6 : vector<1x128xf32>
    %8 = vector.broadcast %7 : vector<1x128xf32> to vector<8x128xf32>
    %9 = arith.subf %3, %8 : vector<8x128xf32>
    %10 = arith.mulf %9, %9 : vector<8x128xf32>
    %cst_5 = arith.constant dense<0.000000e+00> : vector<128xf32>
    %11 = vector.multi_reduction <add>, %10, %cst_5 [0] : vector<8x128xf32> to vector<128xf32>
    %12 = vector.shape_cast %11 : vector<128xf32> to vector<1x128xf32>
    %cst_6 = arith.constant 1.250000e-01 : f32
    %13 = vector.broadcast %cst_6 : f32 to vector<1x128xf32>
    %14 = arith.mulf %12, %13 : vector<1x128xf32>
    %c0_7 = arith.constant 0 : index
    %c0_8 = arith.constant 0 : index
    %15 = vector.load %arg3[%c0_7, %c0_8] : memref<1x128xf32, #tpu.memory_space<vmem>>, vector<1x128xf32>
    %cst_9 = arith.constant 9.99999974E-6 : f32
    %16 = vector.broadcast %cst_9 : f32 to vector<1x128xf32>
    %17 = arith.addf %14, %16 : vector<1x128xf32>
    %18 = math.rsqrt %17 : vector<1x128xf32>
    %19 = arith.mulf %15, %18 : vector<1x128xf32>
    %20 = vector.broadcast %19 : vector<1x128xf32> to vector<8x128xf32>
    %21 = arith.mulf %9, %20 : vector<8x128xf32>
    %c0_10 = arith.constant 0 : index
    %c0_11 = arith.constant 0 : index
    %22 = vector.load %arg4[%c0_10, %c0_11] : memref<1x128xf32, #tpu.memory_space<vmem>>, vector<1x128xf32>
    %23 = vector.broadcast %22 : vector<1x128xf32> to vector<8x128xf32>
    %24 = arith.addf %21, %23 : vector<8x128xf32>
    %cst_12 = arith.constant 0.000000e+00 : f32
    %25 = vector.broadcast %cst_12 : f32 to vector<8x128xf32>
    %26 = arith.maximumf %24, %25 : vector<8x128xf32>
    %c0_13 = arith.constant 0 : index
    %c0_14 = arith.constant 0 : index
    %27 = vector.load %arg5[%c0_13, %c0_14] : memref<8x128xf32, #tpu.memory_space<vmem>>, vector<8x128xf32>
    tpu.vector_store %arg5[%c0_13, %c0_14], %26 {strides = array<i32>} : memref<8x128xf32, #tpu.memory_space<vmem>>, vector<8x128xf32>,
    %c0_15 = arith.constant 0 : index
    %c0_16 = arith.constant 0 : index
    %28 = vector.load %arg6[%c0_15, %c0_16] : memref<1x128xf32, #tpu.memory_space<vmem>>, vector<1x128xf32>
    tpu.vector_store %arg6[%c0_15, %c0_16], %7 {strides = array<i32>} : memref<1x128xf32, #tpu.memory_space<vmem>>, vector<1x128xf32>,
    %c0_17 = arith.constant 0 : index
    %c0_18 = arith.constant 0 : index
    %29 = vector.load %arg7[%c0_17, %c0_18] : memref<1x128xf32, #tpu.memory_space<vmem>>, vector<1x128xf32>
    tpu.vector_store %arg7[%c0_17, %c0_18], %14 {strides = array<i32>} : memref<1x128xf32, #tpu.memory_space<vmem>>, vector<1x128xf32>,
    return
  }
  func.func @transform_0(%arg0: i32) -> (i32, i32) {
    %c0_i32 = arith.constant 0 : i32
    %c0_i32_0 = arith.constant 0 : i32
    %c0_i32_1 = arith.constant 0 : i32
    return %c0_i32, %c0_i32_0 : i32, i32
  }
  func.func @transform_1(%arg0: i32) -> (i32, i32) {
    %c0_i32 = arith.constant 0 : i32
    %c0_i32_0 = arith.constant 0 : i32
    return %c0_i32, %arg0 : i32, i32
  }
  func.func @transform_2(%arg0: i32) -> (i32, i32) {
    %c0_i32 = arith.constant 0 : i32
    %c0_i32_0 = arith.constant 0 : i32
    return %c0_i32, %arg0 : i32, i32
  }
  func.func @transform_3(%arg0: i32) -> (i32, i32) {
    %c0_i32 = arith.constant 0 : i32
    %c0_i32_0 = arith.constant 0 : i32
    return %c0_i32, %arg0 : i32, i32
  }
  func.func @transform_4(%arg0: i32) -> (i32, i32) {
    %c0_i32 = arith.constant 0 : i32
    %c0_i32_0 = arith.constant 0 : i32
    return %c0_i32, %arg0 : i32, i32
  }
  func.func @transform_5(%arg0: i32) -> (i32, i32) {
    %c0_i32 = arith.constant 0 : i32
    %c0_i32_0 = arith.constant 0 : i32
    return %c0_i32, %arg0 : i32, i32
  }
  func.func @transform_6(%arg0: i32) -> (i32, i32) {
    %c0_i32 = arith.constant 0 : i32
    %c0_i32_0 = arith.constant 0 : i32
    return %c0_i32, %arg0 : i32, i32
  }
}

</mosaic_0001>

<llo_original>
// kernel: linear_block.1
$region0: #{linear_block.1}
  #allocation0 [shape = 'u32[]', space=smem, size = 0x4, offset = 0x4, fixed_abs, tag = 'smem constant byte address 0x4 - core index']
  #allocation1 [shape = 'u32[72,128]{1,0:T(1,128)}', space=vmem, size = 0x9000, scoped, tag = 'internal scratch']
  %s0 = inlined_call_operand.hbm [shape: f32[8,32], index: 0, kind: input, shape index: {}]
  %s1 = inlined_call_operand.hbm [shape: bf16[32,256], index: 1, kind: input, shape index: {}]
  %s2 = inlined_call_operand.hbm [shape: f32[1,256], index: 2, kind: input, shape index: {}]
  %s3 = inlined_call_operand.vmem [shape: f32[1,256], index: 3, kind: input, shape index: {}]
  %s4 = inlined_call_operand.hbm [shape: f32[8,256], index: 4, kind: output, shape index: {0}]
  %s5 = inlined_call_operand.hbm [shape: f32[1,256], index: 5, kind: output, shape index: {1}]
  %s6 = inlined_call_operand.hbm [shape: f32[1,256], index: 6, kind: output, shape index: {2}]
  %7 = xla_tuple %s4, %s5, %s6
  %s8 = sld [smem:[#allocation0]]
  $region77: #{linear_block.1} parent=0
    _
  %s10 = ssub.s32 1, %s8
  %s11 = scalar_select 0, %s10, %s8
  $region1: #{linear_block.1} parent=0
    #allocation2 [shape = 'u8[4096]{0}', space=vmem, size = 0x1000, scoped, tag = 'input window, operand 0, single buffered']
    #allocation3 [shape = 's32[2]{0}', space=sflag, size = 0x8, scoped, tag = 'scoped memory for linear_block.1']
    #allocation4 [shape = 's32[2]{0}', space=sflag, size = 0x8, scoped, tag = 'scoped memory for linear_block.1']
    #allocation5 [shape = 'u8[16384]{0}', space=vmem, size = 0x4000, scoped, tag = 'input window, operand 1']
    #allocation6 [shape = 's32[2]{0}', space=sflag, size = 0x8, scoped, tag = 'scoped memory for linear_block.1']
    #allocation7 [shape = 'u8[1024]{0}', space=vmem, size = 0x400, scoped, tag = 'input window, operand 2']
    #allocation8 [shape = 'u8[8192]{0}', space=vmem, size = 0x2000, scoped, tag = 'output window, operand 0']
    #allocation9 [shape = 'u8[1024]{0}', space=vmem, size = 0x400, scoped, tag = 'output window, operand 1']
    #allocation10 [shape = 's32[2]{0}', space=sflag, size = 0x8, scoped, tag = 'scoped memory for linear_block.1']
    #allocation11 [shape = 'u8[1024]{0}', space=vmem, size = 0x400, scoped, tag = 'output window, operand 2']
    %12 = vsyncpa [#allocation3], 0
    %13 = vsyncpa [#allocation6], 0
    %s14 = scalar_lea.sflag [#allocation6], 1
    %15 = vsyncpa %s14, 0
    %16 = vsyncpa [#allocation4], 0
    %s17 = scalar_lea.sflag [#allocation4], 1
    %18 = vsyncpa %s17, 0
    %19 = vsyncpa [#allocation10], 0
    %s20 = scalar_lea.sflag [#allocation10], 1
    %21 = vsyncpa %s20, 0
    loop: start=0, step=1, limit=4
    $region2: #{linear_block.1} parent=1 // loop_pre_header
      _
    $region3: #{linear_block.1} parent=1 // loop_header
      %s23 = sphi 0, %s27
      %p24 = scmp.ge.s32.totalorder %s23, 4
      %s31 = sphi 0, %s31
      %s33 = sphi 0, %s31
      %s34 = sphi 0, %s33
      %s48 = sphi 0, %s34
      %s54 = sphi 0, %s56
      %s57 = sphi 0, %s54
      %s58 = sphi 0, %s57
      %s74 = sphi 0, %s58
      %s80 = sphi 0, %s82
      %s83 = sphi 0, %s80
      %s84 = sphi 0, %s83
      %s100 = sphi 0, %s84
      %s106 = sphi 0, %s108
      %s109 = sphi 0, %s106
      %s110 = sphi 0, %s109
      %s126 = sphi 0, %s110
      %s132 = sphi 0, %s134
      %s135 = sphi 0, %s132
      %s136 = sphi 0, %s135
      %s152 = sphi 0, %s136
      %s158 = sphi 0, %s160
      %s161 = sphi 0, %s158
      %s162 = sphi 0, %s161
      %s178 = sphi 0, %s162
      %s184 = sphi 0, %s186
      %s187 = sphi 0, %s184
      %s188 = sphi 0, %s187
      %s204 = sphi 0, %s188
    $region4: #{linear_block.1} parent=1 // loop_header_branch
      %26 = sbr.rel (%p24) target = $region8
    $region5: #{linear_block.1} parent=1 // loop_body
      %s28 = ssub.s32 %s23, 1
      %s29 = ssub.s32 %s23, 2
      %s30 = sadd.s32 %s23, 1
      %s32 = sadd.s32 %s31, 1
      %p35 = scmp.eq.s32.totalorder %s23, 1
      %p36 = scmp.ne.s32.totalorder %s31, %s33
      %p37 = scmp.eq.s32.totalorder %s23, 0
      %p38 = por %p36, %p37
      %p39 = scmp.ne.s32.totalorder %s31, %s33
      %p40 = scmp.eq.s32.totalorder %s28, 1
      %p41 = por %p39, %p40
      %p42 = scmp.ne.s32.totalorder %s33, %s34
      %p43 = scmp.eq.s32.totalorder %s28, 0
      %p44 = por %p42, %p43
      %p45 = scmp.ne.s32.totalorder %s33, %s34
      %p46 = scmp.eq.s32.totalorder %s29, 1
      %p47 = por %p45, %p46
      %p49 = scmp.ne.s32.totalorder %s34, %s48
      %p50 = scmp.eq.s32.totalorder %s29, 0
      %p51 = por %p49, %p50
      %s52 = ssub.s32 %s23, %s30
      %p53 = scmp.eq.s32.totalorder %s52, 0
      %s55 = sadd.s32 %s54, 1
      %s56 = scalar_select %p53, %s54, %s55
      %p59 = pneg %p53
      %p60 = scmp.eq.s32.totalorder %s23, 1
      %p61 = por %p59, %p60
      %p62 = scmp.ne.s32.totalorder %s54, %s57
      %p63 = scmp.eq.s32.totalorder %s23, 0
      %p64 = por %p62, %p63
      %p65 = scmp.ne.s32.totalorder %s54, %s57
      %p66 = scmp.eq.s32.totalorder %s28, 1
      %p67 = por %p65, %p66
      %p68 = scmp.ne.s32.totalorder %s57, %s58
      %p69 = scmp.eq.s32.totalorder %s28, 0
      %p70 = por %p68, %p69
      %p71 = scmp.ne.s32.totalorder %s57, %s58
      %p72 = scmp.eq.s32.totalorder %s29, 1
      %p73 = por %p71, %p72
      %p75 = scmp.ne.s32.totalorder %s58, %s74
      %p76 = scmp.eq.s32.totalorder %s29, 0
      %p77 = por %p75, %p76
      %s78 = ssub.s32 %s23, %s30
      %p79 = scmp.eq.s32.totalorder %s78, 0
      %s81 = sadd.s32 %s80, 1
      %s82 = scalar_select %p79, %s80, %s81
      %p85 = pneg %p79
      %p86 = scmp.eq.s32.totalorder %s23, 1
      %p87 = por %p85, %p86
      %p88 = scmp.ne.s32.totalorder %s80, %s83
      %p89 = scmp.eq.s32.totalorder %s23, 0
      %p90 = por %p88, %p89
      %p91 = scmp.ne.s32.totalorder %s80, %s83
      %p92 = scmp.eq.s32.totalorder %s28, 1
      %p93 = por %p91, %p92
      %p94 = scmp.ne.s32.totalorder %s83, %s84
      %p95 = scmp.eq.s32.totalorder %s28, 0
      %p96 = por %p94, %p95
      %p97 = scmp.ne.s32.totalorder %s83, %s84
      %p98 = scmp.eq.s32.totalorder %s29, 1
      %p99 = por %p97, %p98
      %p101 = scmp.ne.s32.totalorder %s84, %s100
      %p102 = scmp.eq.s32.totalorder %s29, 0
      %p103 = por %p101, %p102
      %s104 = ssub.s32 %s23, %s30
      %p105 = scmp.eq.s32.totalorder %s104, 0
      %s107 = sadd.s32 %s106, 1
      %s108 = scalar_select %p105, %s106, %s107
      %p111 = pneg %p105
      %p112 = scmp.eq.s32.totalorder %s23, 1
      %p113 = por %p111, %p112
      %p114 = scmp.ne.s32.totalorder %s106, %s109
      %p115 = scmp.eq.s32.totalorder %s23, 0
      %p116 = por %p114, %p115
      %p117 = scmp.ne.s32.totalorder %s106, %s109
      %p118 = scmp.eq.s32.totalorder %s28, 1
      %p119 = por %p117, %p118
      %p120 = scmp.ne.s32.totalorder %s109, %s110
      %p121 = scmp.eq.s32.totalorder %s28, 0
      %p122 = por %p120, %p121
      %p123 = scmp.ne.s32.totalorder %s109, %s110
      %p124 = scmp.eq.s32.totalorder %s29, 1
      %p125 = por %p123, %p124
      %p127 = scmp.ne.s32.totalorder %s110, %s126
      %p128 = scmp.eq.s32.totalorder %s29, 0
      %p129 = por %p127, %p128
      %s130 = ssub.s32 %s23, %s30
      %p131 = scmp.eq.s32.totalorder %s130, 0
      %s133 = sadd.s32 %s132, 1
      %s134 = scalar_select %p131, %s132, %s133
      %p137 = pneg %p131
      %p138 = scmp.eq.s32.totalorder %s23, 1
      %p139 = por %p137, %p138
      %p140 = scmp.ne.s32.totalorder %s132, %s135
      %p141 = scmp.eq.s32.totalorder %s23, 0
      %p142 = por %p140, %p141
      %p143 = scmp.ne.s32.totalorder %s132, %s135
      %p144 = scmp.eq.s32.totalorder %s28, 1
      %p145 = por %p143, %p144
      %p146 = scmp.ne.s32.totalorder %s135, %s136
      %p147 = scmp.eq.s32.totalorder %s28, 0
      %p148 = por %p146, %p147
      %p149 = scmp.ne.s32.totalorder %s135, %s136
      %p150 = scmp.eq.s32.totalorder %s29, 1
      %p151 = por %p149, %p150
      %p153 = scmp.ne.s32.totalorder %s136, %s152
      %p154 = scmp.eq.s32.totalorder %s29, 0
      %p155 = por %p153, %p154
      %s156 = ssub.s32 %s23, %s30
      %p157 = scmp.eq.s32.totalorder %s156, 0
      %s159 = sadd.s32 %s158, 1
      %s160 = scalar_select %p157, %s158, %s159
      %p163 = pneg %p157
      %p164 = scmp.eq.s32.totalorder %s23, 1
      %p165 = por %p163, %p164
      %p166 = scmp.ne.s32.totalorder %s158, %s161
      %p167 = scmp.eq.s32.totalorder %s23, 0
      %p168 = por %p166, %p167
      %p169 = scmp.ne.s32.totalorder %s158, %s161
      %p170 = scmp.eq.s32.totalorder %s28, 1
      %p171 = por %p169, %p170
      %p172 = scmp.ne.s32.totalorder %s161, %s162
      %p173 = scmp.eq.s32.totalorder %s28, 0
      %p174 = por %p172, %p173
      %p175 = scmp.ne.s32.totalorder %s161, %s162
      %p176 = scmp.eq.s32.totalorder %s29, 1
      %p177 = por %p175, %p176
      %p179 = scmp.ne.s32.totalorder %s162, %s178
      %p180 = scmp.eq.s32.totalorder %s29, 0
      %p181 = por %p179, %p180
      %s182 = ssub.s32 %s23, %s30
      %p183 = scmp.eq.s32.totalorder %s182, 0
      %s185 = sadd.s32 %s184, 1
      %s186 = scalar_select %p183, %s184, %s185
      %p189 = pneg %p183
      %p190 = scmp.eq.s32.totalorder %s23, 1
      %p191 = por %p189, %p190
      %p192 = scmp.ne.s32.totalorder %s184, %s187
      %p193 = scmp.eq.s32.totalorder %s23, 0
      %p194 = por %p192, %p193
      %p195 = scmp.ne.s32.totalorder %s184, %s187
      %p196 = scmp.eq.s32.totalorder %s28, 1
      %p197 = por %p195, %p196
      %p198 = scmp.ne.s32.totalorder %s187, %s188
      %p199 = scmp.eq.s32.totalorder %s28, 0
      %p200 = por %p198, %p199
      %p201 = scmp.ne.s32.totalorder %s187, %s188
      %p202 = scmp.eq.s32.totalorder %s29, 1
      %p203 = por %p201, %p202
      %p205 = scmp.ne.s32.totalorder %s188, %s204
      %p206 = scmp.eq.s32.totalorder %s29, 0
      %p207 = por %p205, %p206
      %p208 = scmp.le.s32.totalorder 1, %s23
      %p209 = scmp.lt.s32.totalorder %s23, 3
      %p210 = pnand %p208, %p209
      %p211 = pneg %p210
      // Predicated region
      $region9: #{linear_block.1} parent=5 // pred_check
        _
      $region10: #{linear_block.1} parent=5 // pred_check_branch
        %213 = sbr.rel (%p210) target = $region12
      $region11: #{linear_block.1} parent=5 // pred_region
        %s214 = ssub.s32 %s23, 1
        // Predicated region
        $region13: #{linear_block.1} parent=11 // pred_check
          %p215 = pneg %p44
        $region14: #{linear_block.1} parent=11 // pred_check_branch
          %217 = sbr.rel (%p215) target = $region16
        $region15: #{linear_block.1} parent=11 // pred_region
          %219 = vsyncadd [#allocation3], 0
          %s221 = sshll.u32 %s0, 4
          %s222 = int_to_ptr.hbm [resolvable:$true] %s221
          %s223 = sshll.u32 [#allocation2], 4
          %s224 = int_to_ptr.vmem [resolvable:$true] %s223
          %226 = dma.hbm_to_vmem [thread:$0]  %s222, 128, %s224, [#allocation3]
        $region16: #{linear_block.1} parent=11 // pred_fallthru
          _
      $region12: #{linear_block.1} parent=5 // pred_fallthru
        _
      %p227 = scmp.lt.s32.totalorder %s23, 2
      // Predicated region
      $region17: #{linear_block.1} parent=5 // pred_check
        %p228 = pneg %p227
      $region18: #{linear_block.1} parent=5 // pred_check_branch
        %230 = sbr.rel (%p228) target = $region20
      $region19: #{linear_block.1} parent=5 // pred_region
        // Predicated region
        $region21: #{linear_block.1} parent=19 // pred_check
          %p231 = pneg %p64
        $region22: #{linear_block.1} parent=19 // pred_check_branch
          %233 = sbr.rel (%p231) target = $region24
        $region23: #{linear_block.1} parent=19 // pred_region
          %s234 = sand.u32 %s23, 1
          %s235 = scalar_lea.sflag [#allocation6], %s234
          %s236 = sand.u32 %s54, 1
          %s237 = smul.addr %s236, 16
          %s238 = scalar_lea.vmem [#allocation5], %s237
          %240 = vsyncadd %s235, 0
          %s241 = smul.addr %s23, 4
          %s242 = scalar_lea.hbm %s1, %s241
          %s243 = sshll.u32 %s242, 4
          %s244 = int_to_ptr.hbm [resolvable:$true] %s243
          %s245 = sshll.u32 %s238, 4
          %s246 = int_to_ptr.vmem [resolvable:$true] %s245
          %251 = dma.hbm_to_vmem [thread:$0]  %s244, 256, %s246, %s235, 128, 64, 4
        $region24: #{linear_block.1} parent=19 // pred_fallthru
          _
        // Predicated region
        $region25: #{linear_block.1} parent=19 // pred_check
          %p252 = pneg %p90
        $region26: #{linear_block.1} parent=19 // pred_check_branch
          %254 = sbr.rel (%p252) target = $region28
        $region27: #{linear_block.1} parent=19 // pred_region
          %s255 = sand.u32 %s23, 1
          %s256 = scalar_lea.sflag [#allocation6], %s255
          %s257 = sand.u32 %s80, 1
          %s258 = scalar_lea.vmem [#allocation7], %s257
          %260 = vsyncadd %s256, 0
          %s261 = scalar_lea.hbm %s2, %s23
          %s263 = sshll.u32 %s261, 4
          %s264 = int_to_ptr.hbm [resolvable:$true] %s263
          %s265 = sshll.u32 %s258, 4
          %s266 = int_to_ptr.vmem [resolvable:$true] %s265
          %268 = dma.hbm_to_vmem [thread:$0]  %s264, 16, %s266, %s256
        $region28: #{linear_block.1} parent=19 // pred_fallthru
          _
        // Predicated region
        $region29: #{linear_block.1} parent=19 // pred_check
          %p269 = pneg %p116
        $region30: #{linear_block.1} parent=19 // pred_check_branch
          %271 = sbr.rel (%p269) target = $region32
        $region31: #{linear_block.1} parent=19 // pred_region
          %p272 = scmp.lt.s32.totalorder %s23, 1
          %s273 = scalar_select %p272, %s23, 1
          %s274 = scalar_lea.vmem %s3, %s273
        $region32: #{linear_block.1} parent=19 // pred_fallthru
          _
      $region20: #{linear_block.1} parent=5 // pred_fallthru
        _
      %p275 = scmp.le.s32.totalorder 1, %s23
      %p276 = scmp.lt.s32.totalorder %s23, 3
      %p277 = pnand %p275, %p276
      %p278 = pneg %p277
      // Predicated region
      $region33: #{linear_block.1} parent=5 // pred_check
        _
      $region34: #{linear_block.1} parent=5 // pred_check_branch
        %280 = sbr.rel (%p277) target = $region36
      $region35: #{linear_block.1} parent=5 // pred_region
        %s281 = ssub.s32 %s23, 1
        // Predicated region
        $region37: #{linear_block.1} parent=35 // pred_check
          %p282 = pneg %p44
        $region38: #{linear_block.1} parent=35 // pred_check_branch
          %284 = sbr.rel (%p282) target = $region40
        $region39: #{linear_block.1} parent=35 // pred_region
          %286 = dma.done [#allocation3], 128
        $region40: #{linear_block.1} parent=35 // pred_fallthru
          _
        %s287 = sand.u32 %s28, 1
        %s288 = scalar_lea.sflag [#allocation6], %s287
        %s289 = sand.u32 %s57, 1
        %s290 = smul.addr %s289, 16
        %s291 = scalar_lea.vmem [#allocation5], %s290
        // Predicated region
        $region41: #{linear_block.1} parent=35 // pred_check
          %p292 = pneg %p70
        $region42: #{linear_block.1} parent=35 // pred_check_branch
          %294 = sbr.rel (%p292) target = $region44
        $region43: #{linear_block.1} parent=35 // pred_region
          %296 = dma.done %s288, 256
        $region44: #{linear_block.1} parent=35 // pred_fallthru
          _
        %s297 = sand.u32 %s28, 1
        %s298 = scalar_lea.sflag [#allocation6], %s297
        %s299 = sand.u32 %s83, 1
        %s300 = scalar_lea.vmem [#allocation7], %s299
        // Predicated region
        $region45: #{linear_block.1} parent=35 // pred_check
          %p301 = pneg %p96
        $region46: #{linear_block.1} parent=35 // pred_check_branch
          %303 = sbr.rel (%p301) target = $region48
        $region47: #{linear_block.1} parent=35 // pred_region
          %305 = dma.done %s298, 16
        $region48: #{linear_block.1} parent=35 // pred_fallthru
          _
        %p306 = pneg %p44
        %p307 = pneg %p41
        %s308 = sand.u32 %s28, 1
        %s309 = scalar_lea.sflag [#allocation6], %s308
        %s310 = sand.u32 %s57, 1
        %s311 = smul.addr %s310, 16
        %s312 = scalar_lea.vmem [#allocation5], %s311
        %p313 = pneg %p70
        %p314 = pneg %p67
        %s315 = sand.u32 %s28, 1
        %s316 = scalar_lea.sflag [#allocation6], %s315
        %s317 = sand.u32 %s83, 1
        %s318 = scalar_lea.vmem [#allocation7], %s317
        %p319 = pneg %p96
        %p320 = pneg %p93
        %p321 = scmp.lt.s32.totalorder %s28, 1
        %s322 = scalar_select %p321, %s28, 1
        %s323 = scalar_lea.vmem %s3, %s322
        %p324 = pneg %p122
        %p325 = pneg %p119
        %p326 = pneg %p148
        %p327 = pneg %p145
        %s328 = sand.u32 %s135, 1
        %s329 = scalar_lea.sflag [#allocation4], %s328
        %s330 = sand.u32 %s135, 1
        %s331 = smul.addr %s330, 8
        %s332 = scalar_lea.vmem [#allocation8], %s331
        %p333 = pneg %p174
        %p334 = pneg %p171
        %s335 = sand.u32 %s28, 1
        %s336 = scalar_lea.sflag [#allocation10], %s335
        %s337 = sand.u32 %s161, 1
        %s338 = scalar_lea.vmem [#allocation9], %s337
        %p339 = pneg %p200
        %p340 = pneg %p197
        %s341 = sand.u32 %s28, 1
        %s342 = scalar_lea.sflag [#allocation10], %s341
        %s343 = sand.u32 %s187, 1
        %s344 = scalar_lea.vmem [#allocation11], %s343
        %p345 = scmp.lt.s32.totalorder %s28, 1
        %s346 = scalar_select %p345, %s28, 1
        %s347 = scalar_lea.vmem %s3, %s346
        %v349 = vld [vmem:[#allocation2] sm:$0xff]
        %v350 = vpack.c.bf16 %v349, %v349
        %v351 = vld [vmem:[%s291] sm:$0xf]
        %v352 = vld [vmem:[%s291 + $0x4] sm:$0xf]
        %v353 = vld [vmem:[%s291 + $0x8] sm:$0xf]
        %v354 = vld [vmem:[%s291 + $0xc] sm:$0xf]
        %v359 = vunpack.c.l.b16 %v351
        %v360 = vunpack.c.l.b16 %v352
        %v361 = vunpack.c.l.b16 %v353
        %v362 = vunpack.c.l.b16 %v354
        %v363 = vpack.c.b16 %v360, %v359
        %v364 = vpack.c.b16 %v362, %v361
        %vm367 = vcmask 261120
        %v369 = vsel %vm367, %v350, 0
        %371 = vmatpush.bf16.msra.mxu0 0
        %372 = vmatpush.bf16.msra.mxu0 0
        %373 = vmatpush.bf16.msra.mxu0 0
        %374 = vmatpush.bf16.msra.mxu0 0
        %375 = vmatpush.bf16.msra.mxu0 0
        %376 = vmatpush.bf16.msra.mxu0 0
        %377 = vmatpush.bf16.msra.mxu0 %v364
        %378 = vmatpush.bf16.msra.mxu0 %v363
        %379 = vmatmul.bf16.gmra.mxu0 %v369
        %v380 = vpop.f32.mrf.mxu0
        %v381 = vadd.f32 0.0, %v380
        %v382 = vpop.f32.mrf.mxu0
        %383 = vdwg.mxu0
        %v384 = vrot.slane %v381, 4
        %v385 = vadd.f32 %v381, %v384
        %v386 = vrot.slane %v385, 2
        %v387 = vadd.f32 %v385, %v386
        %v388 = vrot.slane %v387, 1
        %v389 = vadd.f32 %v387, %v388
        %v390 = vmul.f32 %v389, 0.125
        %v391 = vsub.f32 %v381, %v390
        %v392 = vmul.f32 %v391, %v391
        %v393 = vrot.slane %v392, 4
        %v394 = vadd.f32 %v392, %v393
        %v395 = vrot.slane %v394, 2
        %v396 = vadd.f32 %v394, %v395
        %v397 = vrot.slane %v396, 1
        %v398 = vadd.f32 %v396, %v397
        %v399 = vmul.f32 %v398, 0.125
        %v400 = vld [vmem:[%s300] sm:$0x1]
        %v401 = vadd.f32 %v399, 1e-05
        %v402 = vrsqrt.pop %v401
        %v403 = vmul.f32 %v402, %v401
        %v404 = vmul.f32 %v403, %v402
        %v405 = vmul.f32 0.5, %v404
        %v406 = vsub.f32 1.5, %v405
        %v407 = vmul.f32 %v402, %v406
        %vm408 = vweird.f32 %v401
        %vm409 = vweird.f32 %v402
        %vm410 = vmor %vm408, %vm409
        %v411 = vsel %vm410, %v402, %v407
        %v412 = vmul.f32 %v400, %v411
        %v414 = vperm.slane %v412, 0
        %v416 = vmul.f32 %v391, %v414
        %v417 = vld [vmem:[%s347] sm:$0x1]
        %v419 = vperm.slane %v417, 0
        %v421 = vadd.f32 %v416, %v419
        %v422 = vmax.f32 %v421, 0.0
        %423 = vst [vmem:[%s332] sm:$0xff] %v422
        %424 = vst [vmem:[%s338] sm:$0x1] %v390
        %425 = vst [vmem:[%s344] sm:$0x1] %v399
        %s426 = sand.u32 %s135, 1
        %s427 = scalar_lea.sflag [#allocation4], %s426
        %s428 = sand.u32 %s135, 1
        %s429 = smul.addr %s428, 8
        %s430 = scalar_lea.vmem [#allocation8], %s429
        %s431 = sand.u32 %s28, 1
        %s432 = scalar_lea.sflag [#allocation10], %s431
        %s433 = sand.u32 %s161, 1
        %s434 = scalar_lea.vmem [#allocation9], %s433
        %s435 = sand.u32 %s28, 1
        %s436 = scalar_lea.sflag [#allocation10], %s435
        %s437 = sand.u32 %s187, 1
        %s438 = scalar_lea.vmem [#allocation11], %s437
        // Predicated region
        $region49: #{linear_block.1} parent=35 // pred_check
          %p439 = pneg %p145
        $region50: #{linear_block.1} parent=35 // pred_check_branch
          %441 = sbr.rel (%p439) target = $region52
        $region51: #{linear_block.1} parent=35 // pred_region
          %443 = vsyncadd %s427, 0
          %s444 = smul.addr %s28, 8
          %s445 = scalar_lea.hbm %s4, %s444
          %s447 = sshll.u32 %s430, 4
          %s448 = int_to_ptr.vmem [resolvable:$true] %s447
          %s449 = sshll.u32 %s445, 4
          %s450 = int_to_ptr.hbm [resolvable:$true] %s449
          %452 = dma.vmem_to_hbm [thread:$0]  %s448, 128, %s450, %s427
        $region52: #{linear_block.1} parent=35 // pred_fallthru
          _
        // Predicated region
        $region53: #{linear_block.1} parent=35 // pred_check
          %p453 = pneg %p171
        $region54: #{linear_block.1} parent=35 // pred_check_branch
          %455 = sbr.rel (%p453) target = $region56
        $region55: #{linear_block.1} parent=35 // pred_region
          %457 = vsyncadd %s432, 0
          %s458 = scalar_lea.hbm %s5, %s28
          %s460 = sshll.u32 %s434, 4
          %s461 = int_to_ptr.vmem [resolvable:$true] %s460
          %s462 = sshll.u32 %s458, 4
          %s463 = int_to_ptr.hbm [resolvable:$true] %s462
          %465 = dma.vmem_to_hbm [thread:$0]  %s461, 16, %s463, %s432
        $region56: #{linear_block.1} parent=35 // pred_fallthru
          _
        // Predicated region
        $region57: #{linear_block.1} parent=35 // pred_check
          %p466 = pneg %p197
        $region58: #{linear_block.1} parent=35 // pred_check_branch
          %468 = sbr.rel (%p466) target = $region60
        $region59: #{linear_block.1} parent=35 // pred_region
          %470 = vsyncadd %s436, 0
          %s471 = scalar_lea.hbm %s6, %s28
          %s473 = sshll.u32 %s438, 4
          %s474 = int_to_ptr.vmem [resolvable:$true] %s473
          %s475 = sshll.u32 %s471, 4
          %s476 = int_to_ptr.hbm [resolvable:$true] %s475
          %478 = dma.vmem_to_hbm [thread:$0]  %s474, 16, %s476, %s436
        $region60: #{linear_block.1} parent=35 // pred_fallthru
          _
      $region36: #{linear_block.1} parent=5 // pred_fallthru
        _
      %p479 = scmp.le.s32.totalorder 2, %s23
      // Predicated region
      $region61: #{linear_block.1} parent=5 // pred_check
        %p480 = pneg %p479
      $region62: #{linear_block.1} parent=5 // pred_check_branch
        %482 = sbr.rel (%p480) target = $region64
      $region63: #{linear_block.1} parent=5 // pred_region
        %s483 = ssub.s32 %s23, 2
        // Predicated region
        $region65: #{linear_block.1} parent=63 // pred_check
          %p484 = pneg %p151
        $region66: #{linear_block.1} parent=63 // pred_check_branch
          %486 = sbr.rel (%p484) target = $region68
        $region67: #{linear_block.1} parent=63 // pred_region
          %s487 = sand.u32 %s136, 1
          %s488 = scalar_lea.sflag [#allocation4], %s487
          %s489 = sand.u32 %s136, 1
          %s490 = smul.addr %s489, 8
          %s491 = scalar_lea.vmem [#allocation8], %s490
          %493 = dma.done %s488, 128
        $region68: #{linear_block.1} parent=63 // pred_fallthru
          _
        // Predicated region
        $region69: #{linear_block.1} parent=63 // pred_check
          %p494 = pneg %p177
        $region70: #{linear_block.1} parent=63 // pred_check_branch
          %496 = sbr.rel (%p494) target = $region72
        $region71: #{linear_block.1} parent=63 // pred_region
          %s497 = sand.u32 %s29, 1
          %s498 = scalar_lea.sflag [#allocation10], %s497
          %s499 = sand.u32 %s162, 1
          %s500 = scalar_lea.vmem [#allocation9], %s499
          %502 = dma.done %s498, 16
        $region72: #{linear_block.1} parent=63 // pred_fallthru
          _
        // Predicated region
        $region73: #{linear_block.1} parent=63 // pred_check
          %p503 = pneg %p203
        $region74: #{linear_block.1} parent=63 // pred_check_branch
          %505 = sbr.rel (%p503) target = $region76
        $region75: #{linear_block.1} parent=63 // pred_region
          %s506 = sand.u32 %s29, 1
          %s507 = scalar_lea.sflag [#allocation10], %s506
          %s508 = sand.u32 %s188, 1
          %s509 = scalar_lea.vmem [#allocation11], %s508
          %511 = dma.done %s507, 16
        $region76: #{linear_block.1} parent=63 // pred_fallthru
          _
      $region64: #{linear_block.1} parent=5 // pred_fallthru
        _
    $region6: #{linear_block.1} parent=1 // loop_footer
      %s27 = sadd.s32 1, %s23
    $region7: #{linear_block.1} parent=1 // loop_footer_branch
      %22 = sbr.rel target = $region3
    $region8: #{linear_block.1} parent=1 // loop_exit
      _
    %512 = vsyncpa [#allocation3], 1
    %s513 = scalar_lea.sflag [#allocation3], 1
    %514 = vsyncpa %s513, 1
    %515 = vsyncpa [#allocation6], 1
    %s516 = scalar_lea.sflag [#allocation6], 1
    %517 = vsyncpa %s516, 1
    %518 = vsyncpa [#allocation4], 1
    %s519 = scalar_lea.sflag [#allocation4], 1
    %520 = vsyncpa %s519, 1
    %521 = vsyncpa [#allocation10], 1
    %s522 = scalar_lea.sflag [#allocation10], 1
    %523 = vsyncpa %s522, 1

</llo_original>
